<compile_context>
chip_gen: v7x
topology: tpu7x:2x2x1
jax: 0.10.0
libtpu: 0.0.40
codegen_flags: <defaults>
</compile_context>

<pallas_src>
import functools

import jax
import jax.numpy as jnp
from jax.experimental import pallas as pl
from jax.experimental.pallas import tpu as pltpu

LANES = 128
ROW_TILE = 2048        # max rows per grid step -> 1 MiB per f32 buffer
MIN_SPLIT_ROWS = 512   # never create grid steps smaller than this (~256 KiB/buffer)


def _cdiv(a, b):
    return (a + b - 1) // b


def _round_up(a, b):
    return _cdiv(a, b) * b


def _choose_row_tile(rows):
    """Row-tile heuristic: full extent for small inputs, >= ~4 steps for big ones."""
    if rows <= MIN_SPLIT_ROWS:
        return rows  # single block equal to the full extent (no 8-alignment needed)
    # Aim for at least ~4 grid steps (keeps both v7x TensorCores and the DMA
    # pipeline busy), each step >= MIN_SPLIT_ROWS and <= ROW_TILE, 8-aligned.
    target = _round_up(_cdiv(rows, 4), 8)
    return max(MIN_SPLIT_ROWS, min(ROW_TILE, target))


def _reparam_kernel(mu_ref, var_ref, eps_ref, o_ref, *, var_coef):
    """latent = mu + eps * sqrt(var) * var_coef, purely elementwise per tile."""
    mu = mu_ref[...].astype(jnp.float32)
    var = var_ref[...].astype(jnp.float32)
    eps = eps_ref[...].astype(jnp.float32)
    o_ref[...] = (mu + eps * jnp.sqrt(var) * var_coef).astype(o_ref.dtype)


def vae_reparameterize(mu, var, var_coef=1.0, key=None, seed=0):
    """latent = mu + N(0,1) * sqrt(var) * var_coef (elementwise, Pallas-fused).

    Note: callers must thread a fresh `key`/`seed` per step; unlike torch's
    stateful global RNG, reusing the same seed reuses identical noise.
    """
    assert mu.shape == var.shape
    orig_shape = mu.shape
    out_dtype = mu.dtype
    n = mu.size
    rows = _cdiv(n, LANES)
    n_pad = rows * LANES

    if key is None:
        key = jax.random.PRNGKey(seed)
    eps_dtype = out_dtype if jnp.issubdtype(out_dtype, jnp.floating) else jnp.float32
    # Draw the noise directly at the lane-dense padded slab shape: no pad op,
    # and the eps HBM stream stays in the (possibly narrow) output dtype.
    eps = jax.random.normal(key, (rows, LANES), dtype=eps_dtype)

    mu_flat = mu.reshape(-1)
    var_flat = var.reshape(-1)
    if n_pad != n:
        # Ragged tail (< 128 elements): pad mu with 0 and var with 1 so sqrt()
        # stays finite; the tail is sliced off below.  This extra pass only
        # triggers when n is not a multiple of 128.
        mu_flat = jnp.pad(mu_flat, (0, n_pad - n))
        var_flat = jnp.pad(var_flat, (0, n_pad - n), constant_values=1)
    mu2 = mu_flat.reshape(rows, LANES)
    var2 = var_flat.reshape(rows, LANES)

    rt = _choose_row_tile(rows)
    grid = (_cdiv(rows, rt),)

    out = pl.pallas_call(
        functools.partial(_reparam_kernel, var_coef=float(var_coef)),
        out_shape=jax.ShapeDtypeStruct((rows, LANES), out_dtype),
        grid_spec=pltpu.PrefetchScalarGridSpec(
            num_scalar_prefetch=0,
            grid=grid,
            in_specs=[
                pl.BlockSpec((rt, LANES), lambda i: (i, 0)),
                pl.BlockSpec((rt, LANES), lambda i: (i, 0)),
                pl.BlockSpec((rt, LANES), lambda i: (i, 0)),
            ],
            out_specs=pl.BlockSpec((rt, LANES), lambda i: (i, 0)),
        ),
        compiler_params=pltpu.CompilerParams(
            # Independent tiles: lets v7x's two TensorCores split the rows.
            dimension_semantics=("parallel",),
        ),
    )(mu2, var2, eps)

    if n_pad != n:
        out = out.reshape(-1)[:n]
    return out.reshape(orig_shape)


def vae_generate(batch_size, latent_size, key=None, seed=0, dtype=jnp.float32):
    """randn((batch_size, latent_size))."""
    # TODO(synk): plain randn has no compute to fuse into a kernel; the on-chip
    # TPU PRNG (pltpu.prng_seed/stateful_normal) has no CPU-interpret lowering,
    # so the noise is drawn with jax.random.normal directly.
    if key is None:
        key = jax.random.PRNGKey(seed)
    return jax.random.normal(key, (batch_size, latent_size), dtype=dtype)


class VAE:
    """JAX/Pallas port of the PyTorch VAE module (reparameterization trick)."""

    def __init__(self, var_coef=1.0, eval_vae=False):
        self.var_coef = var_coef
        self.eval_vae = eval_vae
        # TODO(synk): torch's _device_param / state-dict load hook is framework
        # plumbing with no Pallas equivalent; JAX also needs an explicit
        # key/seed instead of torch's implicit global RNG state.

    def forward(self, mode="train", mu=None, var=None, latent_size=None,
                batch_size=None, key=None, seed=0):
        if mode == "generate":
            return vae_generate(batch_size, latent_size, key=key, seed=seed)
        if mode == "train" or self.eval_vae:
            return vae_reparameterize(mu, var, self.var_coef, key=key, seed=seed)
        return mu

    __call__ = forward


if __name__ == "__main__":
    root = jax.random.PRNGKey(0)
    k_mu, k_var, k_train, k_gen = jax.random.split(root, 4)

    shape = (2, 4, 16, 16)  # (batch, channels, H, W) VAE latent
    mu = jax.random.normal(k_mu, shape, dtype=jnp.float32)
    var = jax.random.uniform(k_var, shape, dtype=jnp.float32,
                             minval=0.1, maxval=2.0)

    vae = VAE(var_coef=1.0, eval_vae=False)

    # --- train mode: latent = mu + eps * sqrt(var) * var_coef ---------------
    latent = vae.forward(mode="train", mu=mu, var=var, key=k_train)
    jax.block_until_ready(latent)
    assert latent.shape == mu.shape and latent.dtype == mu.dtype
    eps_implied = (latent - mu) / jnp.sqrt(var)  # should be ~ N(0, 1)
    assert bool(jnp.all(jnp.isfinite(eps_implied)))
    m = float(jnp.mean(eps_implied))
    s = float(jnp.std(eps_implied))
    assert abs(m) < 0.2, ("noise mean off", m)
    assert 0.8 < s < 1.2, ("noise std off", s)

    # --- eval mode (eval_vae=False): latent == mu exactly -------------------
    latent_eval = vae.forward(mode="eval", mu=mu, var=var)
    assert bool(jnp.array_equal(latent_eval, mu))

    # --- generate mode -------------------------------------------------------
    z = vae.forward(mode="generate", batch_size=2, latent_size=32, key=k_gen)
    jax.block_until_ready(z)
    assert z.shape == (2, 32) and bool(jnp.all(jnp.isfinite(z)))

    print("KERNEL_OK")
</pallas_src>

<mosaic_0001>
module attributes {stable_mosaic.version = 11 : i64} {
  func.func @_reparam_kernel(%arg0: i32, %arg1: memref<16x128xf32, #tpu.memory_space<vmem>>, %arg2: memref<16x128xf32, #tpu.memory_space<vmem>>, %arg3: memref<16x128xf32, #tpu.memory_space<vmem>>, %arg4: memref<16x128xf32, #tpu.memory_space<vmem>>) attributes {dimension_semantics = [#tpu.dimension_semantics<parallel>], iteration_bounds = array<i64: 1>, scalar_prefetch = 0 : i64, scratch_operands = 0 : i64, tpu.core_type = #tpu.core_type<tc>, window_params = [{transform_indices = @transform_0, window_bounds = array<i64: 16, 128>}, {transform_indices = @transform_1, window_bounds = array<i64: 16, 128>}, {transform_indices = @transform_2, window_bounds = array<i64: 16, 128>}, {transform_indices = @transform_3, window_bounds = array<i64: 16, 128>}]} {
    %c0 = arith.constant 0 : index
    %c0_0 = arith.constant 0 : index
    %0 = vector.load %arg1[%c0, %c0_0] : memref<16x128xf32, #tpu.memory_space<vmem>>, vector<16x128xf32>
    %c0_1 = arith.constant 0 : index
    %c0_2 = arith.constant 0 : index
    %1 = vector.load %arg2[%c0_1, %c0_2] : memref<16x128xf32, #tpu.memory_space<vmem>>, vector<16x128xf32>
    %c0_3 = arith.constant 0 : index
    %c0_4 = arith.constant 0 : index
    %2 = vector.load %arg3[%c0_3, %c0_4] : memref<16x128xf32, #tpu.memory_space<vmem>>, vector<16x128xf32>
    %3 = math.sqrt %1 : vector<16x128xf32>
    %4 = arith.mulf %2, %3 : vector<16x128xf32>
    %cst = arith.constant 1.000000e+00 : f32
    %5 = vector.broadcast %cst : f32 to vector<16x128xf32>
    %6 = arith.mulf %4, %5 : vector<16x128xf32>
    %7 = arith.addf %0, %6 : vector<16x128xf32>
    %c0_5 = arith.constant 0 : index
    %c0_6 = arith.constant 0 : index
    %8 = vector.load %arg4[%c0_5, %c0_6] : memref<16x128xf32, #tpu.memory_space<vmem>>, vector<16x128xf32>
    tpu.vector_store %arg4[%c0_5, %c0_6], %7 {strides = array<i32>} : memref<16x128xf32, #tpu.memory_space<vmem>>, vector<16x128xf32>,
    return
  }
  func.func @transform_0(%arg0: i32) -> (i32, i32) {
    %c0_i32 = arith.constant 0 : i32
    %c0_i32_0 = arith.constant 0 : i32
    return %arg0, %c0_i32 : i32, i32
  }
  func.func @transform_1(%arg0: i32) -> (i32, i32) {
    %c0_i32 = arith.constant 0 : i32
    %c0_i32_0 = arith.constant 0 : i32
    return %arg0, %c0_i32 : i32, i32
  }
  func.func @transform_2(%arg0: i32) -> (i32, i32) {
    %c0_i32 = arith.constant 0 : i32
    %c0_i32_0 = arith.constant 0 : i32
    return %arg0, %c0_i32 : i32, i32
  }
  func.func @transform_3(%arg0: i32) -> (i32, i32) {
    %c0_i32 = arith.constant 0 : i32
    %c0_i32_0 = arith.constant 0 : i32
    return %arg0, %c0_i32 : i32, i32
  }
}

</mosaic_0001>

<llo_original>
// kernel: tpu_custom_call.1
$region0: #{tpu_custom_call.1}
  #allocation0 [shape = 'u32[]', space=smem, size = 0x4, offset = 0x4, fixed_abs, tag = 'smem constant byte address 0x4 - core index']
  #allocation1 [shape = 'u32[144,128]{1,0:T(1,128)}', space=vmem, size = 0x12000, scoped, tag = 'internal scratch']
  %s0 = inlined_call_operand.hbm [shape: f32[16,128], index: 0, kind: input, shape index: {}]
  %s1 = inlined_call_operand.hbm [shape: f32[16,128], index: 1, kind: input, shape index: {}]
  %s2 = inlined_call_operand.hbm [shape: f32[16,128], index: 2, kind: input, shape index: {}]
  %s3 = inlined_call_operand.hbm [shape: f32[16,128], index: 3, kind: output, shape index: {}]
  %s4 = sld [smem:[#allocation0]]
  $region34: #{tpu_custom_call.1} parent=0
    _
  %s6 = ssub.s32 1, %s4
  %s7 = scalar_select 0, %s6, %s4
  $region1: #{tpu_custom_call.1} parent=0
    #allocation2 [shape = 'u8[8192]{0}', space=vmem, size = 0x2000, scoped, tag = 'input window, operand 0, single buffered']
    #allocation3 [shape = 's32[1]{0}', space=sflag, size = 0x4, scoped, tag = 'scoped memory for tpu_custom_call.1']
    #allocation4 [shape = 's32[1]{0}', space=sflag, size = 0x4, scoped, tag = 'scoped memory for tpu_custom_call.1']
    #allocation5 [shape = 'u8[8192]{0}', space=vmem, size = 0x2000, scoped, tag = 'input window, operand 1, single buffered']
    #allocation6 [shape = 's32[1]{0}', space=sflag, size = 0x4, scoped, tag = 'scoped memory for tpu_custom_call.1']
    #allocation7 [shape = 'u8[8192]{0}', space=vmem, size = 0x2000, scoped, tag = 'input window, operand 2, single buffered']
    #allocation8 [shape = 'u8[8192]{0}', space=vmem, size = 0x2000, scoped, tag = 'output window, operand 0, single buffered']
    %8 = vsyncpa [#allocation3], 0
    %9 = vsyncpa [#allocation6], 0
    %10 = vsyncpa [#allocation4], 0
    // Predicated region
    $region2: #{tpu_custom_call.1} parent=1 // pred_check
      _
    $region3: #{tpu_custom_call.1} parent=1 // pred_check_branch
      %12 = sbr.rel (0) target = $region5
    $region4: #{tpu_custom_call.1} parent=1 // pred_region
      %s14 = ssub.s32 256, 256
      %15 = vsyncadd [#allocation3], %s14
      %s16 = sshll.u32 [#allocation2], 4
      %s17 = int_to_ptr.vmem [resolvable:$true] %s16
      %22 = dma.hbm_to_vmem [thread:$0]  %s0, 256, %s17, [#allocation3], 128, 128, 8
    $region5: #{tpu_custom_call.1} parent=1 // pred_fallthru
      _
    // Predicated region
    $region6: #{tpu_custom_call.1} parent=1 // pred_check
      _
    $region7: #{tpu_custom_call.1} parent=1 // pred_check_branch
      %24 = sbr.rel (0) target = $region9
    $region8: #{tpu_custom_call.1} parent=1 // pred_region
      %s26 = ssub.s32 256, 256
      %27 = vsyncadd [#allocation6], %s26
      %s28 = sshll.u32 [#allocation5], 4
      %s29 = int_to_ptr.vmem [resolvable:$true] %s28
      %34 = dma.hbm_to_vmem [thread:$0]  %s1, 256, %s29, [#allocation6], 128, 128, 8
    $region9: #{tpu_custom_call.1} parent=1 // pred_fallthru
      _
    // Predicated region
    $region10: #{tpu_custom_call.1} parent=1 // pred_check
      _
    $region11: #{tpu_custom_call.1} parent=1 // pred_check_branch
      %36 = sbr.rel (0) target = $region13
    $region12: #{tpu_custom_call.1} parent=1 // pred_region
      %s38 = ssub.s32 256, 256
      %39 = vsyncadd [#allocation6], %s38
      %s40 = sshll.u32 [#allocation7], 4
      %s41 = int_to_ptr.vmem [resolvable:$true] %s40
      %46 = dma.hbm_to_vmem [thread:$0]  %s2, 256, %s41, [#allocation6], 128, 128, 8
    $region13: #{tpu_custom_call.1} parent=1 // pred_fallthru
      _
    // Predicated region
    $region14: #{tpu_custom_call.1} parent=1 // pred_check
      _
    $region15: #{tpu_custom_call.1} parent=1 // pred_check_branch
      %48 = sbr.rel (0) target = $region17
    $region16: #{tpu_custom_call.1} parent=1 // pred_region
      %49 = dma.done [#allocation3], 256
    $region17: #{tpu_custom_call.1} parent=1 // pred_fallthru
      _
    // Predicated region
    $region18: #{tpu_custom_call.1} parent=1 // pred_check
      _
    $region19: #{tpu_custom_call.1} parent=1 // pred_check_branch
      %51 = sbr.rel (0) target = $region21
    $region20: #{tpu_custom_call.1} parent=1 // pred_region
      %52 = dma.done [#allocation6], 256
    $region21: #{tpu_custom_call.1} parent=1 // pred_fallthru
      _
    // Predicated region
    $region22: #{tpu_custom_call.1} parent=1 // pred_check
      _
    $region23: #{tpu_custom_call.1} parent=1 // pred_check_branch
      %54 = sbr.rel (0) target = $region25
    $region24: #{tpu_custom_call.1} parent=1 // pred_region
      %55 = dma.done [#allocation6], 256
    $region25: #{tpu_custom_call.1} parent=1 // pred_fallthru
      _
    %v56 = vld [vmem:[#allocation2] sm:$0xff]
    %v57 = vld [vmem:[#allocation2 + $0x8] sm:$0xff]
    %v58 = vld [vmem:[#allocation5] sm:$0xff]
    %v59 = vld [vmem:[#allocation5 + $0x8] sm:$0xff]
    %v60 = vld [vmem:[#allocation7] sm:$0xff]
    %v61 = vld [vmem:[#allocation7 + $0x8] sm:$0xff]
    %v62 = vrsqrt.pop %v58
    %v63 = vmul.f32 %v58, %v62
    %vm64 = vcmp.eq.f32.partialorder %v58, inf
    %v65 = vsel %vm64, %v58, %v63
    %vm66 = vcmp.eq.f32.partialorder %v58, 0.0
    %v67 = vand.u32 %v58, 2147483648
    %v68 = vsel %vm66, %v67, %v65
    %v69 = vrsqrt.pop %v59
    %v70 = vmul.f32 %v59, %v69
    %vm71 = vcmp.eq.f32.partialorder %v59, inf
    %v72 = vsel %vm71, %v59, %v70
    %vm73 = vcmp.eq.f32.partialorder %v59, 0.0
    %v74 = vand.u32 %v59, 2147483648
    %v75 = vsel %vm73, %v74, %v72
    %v76 = vmul.f32 %v60, %v68
    %v77 = vmul.f32 %v61, %v75
    %v78 = vadd.f32 %v56, %v76
    %v79 = vadd.f32 %v57, %v77
    %80 = vst [vmem:[#allocation8] sm:$0xff] %v78
    %81 = vst [vmem:[#allocation8 + $0x8] sm:$0xff] %v79
    // Predicated region
    $region26: #{tpu_custom_call.1} parent=1 // pred_check
      _
    $region27: #{tpu_custom_call.1} parent=1 // pred_check_branch
      %83 = sbr.rel (0) target = $region29
    $region28: #{tpu_custom_call.1} parent=1 // pred_region
      %s85 = ssub.s32 256, 256
      %86 = vsyncadd [#allocation4], %s85
      %s87 = sshll.u32 [#allocation8], 4
      %s88 = int_to_ptr.vmem [resolvable:$true] %s87
      %93 = dma.vmem_to_hbm [thread:$0]  %s88, 256, %s3, [#allocation4], 128, 128, 8
    $region29: #{tpu_custom_call.1} parent=1 // pred_fallthru
      _
    // Predicated region
    $region30: #{tpu_custom_call.1} parent=1 // pred_check
      _
    $region31: #{tpu_custom_call.1} parent=1 // pred_check_branch
      %95 = sbr.rel (0) target = $region33
    $region32: #{tpu_custom_call.1} parent=1 // pred_region
      %96 = dma.done [#allocation4], 256
    $region33: #{tpu_custom_call.1} parent=1 // pred_fallthru
      _
    %97 = vsyncpa [#allocation3], 1
    %98 = vsyncpa [#allocation6], 1
    %99 = vsyncpa [#allocation4], 1

</llo_original>
